<compile_context>
chip_gen: v5e
topology: v5e:2x2
jax: 0.10.0
libtpu: 0.0.40
codegen_flags: <defaults>
</compile_context>

<pallas_src>
import functools

import jax
import jax.numpy as jnp
from jax.experimental import pallas as pl
from jax.experimental.pallas import tpu as pltpu


def _round_up(x, m):
    return (x + m - 1) // m * m


# ----------------------------------------------------------------------------
# Pallas kernel: whole forward pass, ONE input DMA (packed slab), ONE output.
# ----------------------------------------------------------------------------
def layout_graph_kernel(slab_ref, out_ref, *, n_pad, num_labels, h1, c,
                        o_t12, o_m1, o_g2, o_bg1, o_bg2):
    f32 = jnp.float32
    w = num_labels + h1          # width of the fused [one-hot | bbox-hidden] operand

    # --- per-call data (first 3*n_pad rows of the slab, packed by the wrapper) ---
    bbox_aug = slab_ref[0:n_pad, 0:8]                      # [bbox | 1 | 0 0 0]
    a = slab_ref[n_pad:2 * n_pad, 0:n_pad]                 # GCN-normalized adjacency
    labels_f = slab_ref[2 * n_pad:3 * n_pad, 0:1]          # labels stored as exact f32

    # --- static folded weights (8-row-aligned blocks, lane offset 0) ---
    t12 = slab_ref[o_t12:o_t12 + w, 0:c]   # [w_emb@Wg1[:E]+b_m2@Wg1[E:] ; w_m2@Wg1[E:]]
    wm1 = slab_ref[o_m1:o_m1 + 8, 0:w]     # bbox-MLP-1 weight (+bias row), lanes [L, w)
    wg2 = slab_ref[o_g2:o_g2 + c, 0:c]     # GCNConv-2 weight
    b_g1 = slab_ref[o_bg1:o_bg1 + 1, 0:c]
    b_g2 = slab_ref[o_bg2:o_bg2 + 1, 0:c]

    # nn.Embedding(label): one-hot generated in-kernel in lanes [0, L) of a
    # width-w tile (valid labels < L, so lanes [L, w) stay zero and can carry
    # the bbox hidden state without any concat).
    iota = jax.lax.broadcasted_iota(jnp.int32, (n_pad, w), 1)
    onehot_w = (iota == labels_f.astype(jnp.int32)).astype(f32)

    # bbox MLP layer 1 (bias folded via the ones column; weight pre-shifted so
    # the ReLU output lands in lanes [L, w)).
    h_w = jnp.maximum(jnp.dot(bbox_aug, wm1, preferred_element_type=f32), 0.0)

    # x @ Wg1 with x = concat([label_emb, bbox_emb], -1): the embedding matmul,
    # MLP layer 2 and the concat are all folded into ONE MXU push.
    xw = jnp.dot(onehot_w + h_w, t12, preferred_element_type=f32)

    # GCNConv 1: A (X W1) + b1, then ReLU (BasicGNN inter-layer activation).
    x1 = jnp.maximum(jnp.dot(a, xw, preferred_element_type=f32) + b_g1, 0.0)
    # GCNConv 2 (last layer: no activation; readout=None -> node embeddings).
    xw2 = jnp.dot(x1, wg2, preferred_element_type=f32)
    out_ref[...] = (jnp.dot(a, xw2, preferred_element_type=f32)
                    + b_g2).astype(out_ref.dtype)


# ----------------------------------------------------------------------------
# Host-side glue: adjacency normalization, weight folding/packing, pallas_call
# ----------------------------------------------------------------------------
def gcn_normalized_adjacency(edge_index, num_nodes):
    """Dense GCNConv normalization (directed, multiplicity preserving):
    aggregate at dst from src with weight deg(dst)^-1/2 * deg(src)^-1/2, where
    deg = in-degree + 1 (unit self loops added to every node).
    TODO(synk): pre-existing self-loop edges are replaced by the unit self loop
    (PyG add_remaining_self_loops semantics assumed)."""
    src, dst = edge_index[0], edge_index[1]
    w = (src != dst).astype(jnp.float32)
    adj = jnp.zeros((num_nodes, num_nodes), jnp.float32)
    adj = adj.at[dst, src].add(w)
    adj = adj + jnp.eye(num_nodes, dtype=jnp.float32)
    dinv = jax.lax.rsqrt(adj.sum(axis=-1))          # deg >= 1 -> finite
    return adj * dinv[:, None] * dinv[None, :]


def fold_and_pack_weights(params):
    """Fold the linear chains offline and pack all weights into one 128-lane
    slab (8-row-aligned blocks).  Called ONCE per parameter set."""
    w_emb = params["w_emb"]                       # (L, E)
    w_m1, b_m1 = params["w_m1"], params["b_m1"]   # (4, H1), (1, H1)
    w_m2, b_m2 = params["w_m2"], params["b_m2"]   # (H1, H2), (1, H2)
    w_g1, b_g1 = params["w_g1"], params["b_g1"]   # (E+H2, C), (1, C)
    w_g2, b_g2 = params["w_g2"], params["b_g2"]   # (C, C), (1, C)

    num_labels, e = w_emb.shape
    h1 = w_m1.shape[1]
    c = w_g1.shape[1]
    w = num_labels + h1
    width = _round_up(max(128, w, c), 128)

    # T1 absorbs the embedding table, Wg1[:E] and (legal because every one-hot
    # row sums to exactly 1) the MLP layer-2 bias; T2 absorbs w_m2 and Wg1[E:].
    # Stacking them gives the single fused lift weight for one MXU push.
    t1 = w_emb @ w_g1[:e, :] + b_m2 @ w_g1[e:, :]            # (L, C)
    t2 = w_m2 @ w_g1[e:, :]                                  # (H1, C)
    t12 = jnp.concatenate([t1, t2], axis=0)                  # (L+H1, C)

    # bbox-MLP layer-1 weight with its bias as an extra row (ones-column trick),
    # padded to 8 rows and shifted right by L lanes so its ReLU output aligns
    # with t2's rows inside the fused operand.
    wm1_rows = jnp.concatenate(
        [w_m1, b_m1, jnp.zeros((8 - w_m1.shape[0] - 1, h1), jnp.float32)],
        axis=0)                                              # (8, H1)
    wm1_shift = jnp.concatenate(
        [jnp.zeros((8, num_labels), jnp.float32), wm1_rows], axis=1)  # (8, L+H1)

    blocks = [t12, wm1_shift, w_g2, b_g1, b_g2]
    offs, padded, cur = [], [], 0
    for blk in blocks:
        offs.append(cur)
        rows = _round_up(blk.shape[0], 8)
        padded.append(jnp.pad(blk, ((0, rows - blk.shape[0]),
                                    (0, width - blk.shape[1]))))
        cur += rows
    slab_w = jnp.concatenate(padded, axis=0).astype(jnp.float32)

    # TODO(synk): for the large-N path store the slab (and A_norm) in bf16 and
    # keep f32 accumulation in-kernel; kept f32 here (negligible at N=8).
    dims = dict(num_labels=num_labels, h1=h1, c=c, width=width)
    return slab_w, tuple(offs), dims


def make_layout_graph_forward(params):
    """Fold/pack the weights ONCE (hoisted out of the per-call path) and return
    a jitted forward: the per-call host work (adjacency build + slab assembly)
    fuses into a single XLA dispatch feeding a single-DMA Pallas kernel."""
    slab_w, offs_w, dims = fold_and_pack_weights(params)
    slab_w = jax.device_put(slab_w)
    num_labels, h1, c, width = (dims["num_labels"], dims["h1"], dims["c"],
                                dims["width"])

    @jax.jit
    def forward(labels, bbox, edge_index):
        n = labels.shape[0]
        n_pad = _round_up(n, 8)
        f32 = jnp.float32

        # TODO(synk): A_norm could be built fully in-kernel from SMEM-resident
        # edge_index (scalar loop over edges); kept in the jitted wrapper since
        # it is part of the same single dispatch at these shapes.
        a_norm = gcn_normalized_adjacency(edge_index, n)

        # Per-call block: bbox (+ ones bias column), A_norm and labels-as-f32
        # packed into the leading rows of the SAME slab -> ONE input DMA total.
        bbox_blk = jnp.pad(
            jnp.concatenate([bbox.astype(f32), jnp.ones((n, 1), f32)], axis=1),
            ((0, n_pad - n), (0, width - 5)))
        a_blk = jnp.pad(a_norm, ((0, n_pad - n), (0, width - n)))
        lbl_blk = jnp.pad(labels.astype(f32)[:, None],
                          ((0, n_pad - n), (0, width - 1)))
        slab = jnp.concatenate([bbox_blk, a_blk, lbl_blk, slab_w], axis=0)

        base = 3 * n_pad
        kern = functools.partial(
            layout_graph_kernel, n_pad=n_pad, num_labels=num_labels, h1=h1, c=c,
            o_t12=base + offs_w[0], o_m1=base + offs_w[1], o_g2=base + offs_w[2],
            o_bg1=base + offs_w[3], o_bg2=base + offs_w[4])

        w = num_labels + h1
        flops = 2 * n_pad * (8 * w + w * c + c * c) + 4 * n_pad * n_pad * c
        bytes_accessed = 4 * (slab.size + n_pad * c)

        out = pl.pallas_call(
            kern,
            out_shape=jax.ShapeDtypeStruct((n_pad, c), jnp.float32),
            in_specs=[pl.BlockSpec(memory_space=pltpu.MemorySpace.VMEM)],
            out_specs=pl.BlockSpec(memory_space=pltpu.MemorySpace.VMEM),
            cost_estimate=pl.CostEstimate(flops=flops, transcendentals=0,
                                          bytes_accessed=bytes_accessed),
        )(slab)
        return out[:n]

    return forward


def init_params(key, num_labels, label_embedding_dim, mlp_dims,
                gnn_hidden_channels):
    """Deterministic synthetic parameters (module shapes, not a checkpoint)."""
    ks = jax.random.split(key, 6)

    def lin(k, fan_in, fan_out):
        return (jax.random.normal(k, (fan_in, fan_out), jnp.float32)
                / jnp.sqrt(jnp.float32(fan_in)))

    e = label_embedding_dim
    h1, h2 = mlp_dims            # bbox MLP dims: (4, h1, h2)
    c = gnn_hidden_channels      # gnn_out_channels=None -> hidden_channels
    in_ch = e + h2

    return {
        "w_emb": jax.random.normal(ks[0], (num_labels, e), jnp.float32) * 0.1,
        "w_m1": lin(ks[1], 4, h1),
        "b_m1": jnp.zeros((1, h1), jnp.float32),
        "w_m2": lin(ks[2], h1, h2),
        "b_m2": jnp.zeros((1, h2), jnp.float32),
        "w_g1": lin(ks[3], in_ch, c),
        "b_g1": jnp.zeros((1, c), jnp.float32),
        "w_g2": lin(ks[4], c, c),
        "b_g2": jnp.zeros((1, c), jnp.float32),
    }


def reference_forward(labels, bbox, edge_index, params, num_labels):
    """Pure-JAX reference of the unfolded module forward (same A_norm)."""
    a = gcn_normalized_adjacency(edge_index, labels.shape[0])
    onehot = jax.nn.one_hot(labels, num_labels, dtype=jnp.float32)
    label_emb = onehot @ params["w_emb"]
    h = jax.nn.relu(bbox @ params["w_m1"] + params["b_m1"])
    bbox_emb = h @ params["w_m2"] + params["b_m2"]
    x = jnp.concatenate([label_emb, bbox_emb], axis=-1)
    x1 = jax.nn.relu(a @ (x @ params["w_g1"]) + params["b_g1"])
    return a @ (x1 @ params["w_g2"]) + params["b_g2"]


if __name__ == "__main__":
    # Model config (small, consistent with the module's __init__):
    NUM_LABELS = 16
    LABEL_EMB_DIM = 16
    BBOX_MLP_DIMS = (32, 16)     # bbox_embedding_layer_dims -> MLP(4, 32, 16)
    GNN_HIDDEN = 32
    # gnn_num_layers = 2, gnn_out_channels = None, use_edge_attr = False,
    # readout = None  -> output is per-node embeddings (N, GNN_HIDDEN)

    N_NODES = 8
    N_EDGES = 12

    key = jax.random.PRNGKey(0)
    k_lbl, k_bbox, k_edge, k_par = jax.random.split(key, 4)

    labels = jax.random.randint(k_lbl, (N_NODES,), 0, NUM_LABELS, dtype=jnp.int32)
    bbox = jax.random.uniform(k_bbox, (N_NODES, 4), jnp.float32)
    edge_index = jax.random.randint(k_edge, (2, N_EDGES), 0, N_NODES,
                                    dtype=jnp.int32)

    params = init_params(k_par, NUM_LABELS, LABEL_EMB_DIM, BBOX_MLP_DIMS,
                         GNN_HIDDEN)

    # Weight folding/packing hoisted out of the per-call path; forward is jitted.
    forward = make_layout_graph_forward(params)
    out = jax.block_until_ready(forward(labels, bbox, edge_index))

    ref = reference_forward(labels, bbox, edge_index, params, NUM_LABELS)
    assert out.shape == (N_NODES, GNN_HIDDEN) and out.dtype == jnp.float32
    assert jnp.allclose(out, ref, atol=2e-3, rtol=2e-3), \
        float(jnp.max(jnp.abs(out - ref)))
    print("KERNEL_OK")
</pallas_src>

<mosaic_0001>
module attributes {stable_mosaic.version = 11 : i64} {
  func.func @layout_graph_kernel(%arg0: memref<128x128xf32, #tpu.memory_space<vmem>>, %arg1: memref<8x32xf32, #tpu.memory_space<vmem>>) attributes {dimension_semantics = [], scalar_prefetch = 0 : i64, scratch_operands = 0 : i64, tpu.core_type = #tpu.core_type<tc>} {
    %c0 = arith.constant 0 : index
    %c0_0 = arith.constant 0 : index
    %0 = vector.load %arg0[%c0, %c0_0] : memref<128x128xf32, #tpu.memory_space<vmem>>, vector<8x8xf32>
    %c8 = arith.constant 8 : index
    %c0_1 = arith.constant 0 : index
    %1 = vector.load %arg0[%c8, %c0_1] : memref<128x128xf32, #tpu.memory_space<vmem>>, vector<8x8xf32>
    %c16 = arith.constant 16 : index
    %c0_2 = arith.constant 0 : index
    %2 = vector.load %arg0[%c16, %c0_2] : memref<128x128xf32, #tpu.memory_space<vmem>>, vector<8x1xf32>
    %c24 = arith.constant 24 : index
    %c0_3 = arith.constant 0 : index
    %3 = vector.load %arg0[%c24, %c0_3] : memref<128x128xf32, #tpu.memory_space<vmem>>, vector<48x32xf32>
    %c72 = arith.constant 72 : index
    %c0_4 = arith.constant 0 : index
    %4 = vector.load %arg0[%c72, %c0_4] : memref<128x128xf32, #tpu.memory_space<vmem>>, vector<8x48xf32>
    %c80 = arith.constant 80 : index
    %c0_5 = arith.constant 0 : index
    %5 = vector.load %arg0[%c80, %c0_5] : memref<128x128xf32, #tpu.memory_space<vmem>>, vector<32x32xf32>
    %c112 = arith.constant 112 : index
    %c0_6 = arith.constant 0 : index
    %6 = vector.load %arg0[%c112, %c0_6] : memref<128x128xf32, #tpu.memory_space<vmem>>, vector<1x32xf32>
    %c120 = arith.constant 120 : index
    %c0_7 = arith.constant 0 : index
    %7 = vector.load %arg0[%c120, %c0_7] : memref<128x128xf32, #tpu.memory_space<vmem>>, vector<1x32xf32>
    %8 = tpu.iota {dimensions = array<i32: 1>} : vector<8x48xi32>
    %9 = arith.fptosi %2 : vector<8x1xf32> to vector<8x1xi32>
    %10 = vector.broadcast %9 : vector<8x1xi32> to vector<8x48xi32>
    %11 = arith.cmpi eq, %8, %10 : vector<8x48xi32>
    %12 = arith.extui %11 : vector<8x48xi1> to vector<8x48xi32>
    %13 = arith.sitofp %12 : vector<8x48xi32> to vector<8x48xf32>
    %cst = arith.constant dense<0.000000e+00> : vector<8x48xf32>
    %14 = tpu.matmul %0, %4, %cst {dimension_numbers = #tpu.dot_dimension_numbers<[1], [0], [0], [1], [0, 0, 1, 1], [], []>} : vector<8x8xf32>, vector<8x48xf32>, vector<8x48xf32> -> vector<8x48xf32>
    %cst_8 = arith.constant 0.000000e+00 : f32
    %15 = vector.broadcast %cst_8 : f32 to vector<8x48xf32>
    %16 = arith.maximumf %14, %15 : vector<8x48xf32>
    %17 = arith.addf %13, %16 : vector<8x48xf32>
    %cst_9 = arith.constant dense<0.000000e+00> : vector<8x32xf32>
    %18 = tpu.matmul %17, %3, %cst_9 {dimension_numbers = #tpu.dot_dimension_numbers<[1], [0], [0], [1], [0, 0, 1, 1], [], []>} : vector<8x48xf32>, vector<48x32xf32>, vector<8x32xf32> -> vector<8x32xf32>
    %cst_10 = arith.constant dense<0.000000e+00> : vector<8x32xf32>
    %19 = tpu.matmul %1, %18, %cst_10 {dimension_numbers = #tpu.dot_dimension_numbers<[1], [0], [0], [1], [0, 0, 1, 1], [], []>} : vector<8x8xf32>, vector<8x32xf32>, vector<8x32xf32> -> vector<8x32xf32>
    %20 = vector.broadcast %6 : vector<1x32xf32> to vector<8x32xf32>
    %21 = arith.addf %19, %20 : vector<8x32xf32>
    %cst_11 = arith.constant 0.000000e+00 : f32
    %22 = vector.broadcast %cst_11 : f32 to vector<8x32xf32>
    %23 = arith.maximumf %21, %22 : vector<8x32xf32>
    %cst_12 = arith.constant dense<0.000000e+00> : vector<8x32xf32>
    %24 = tpu.matmul %23, %5, %cst_12 {dimension_numbers = #tpu.dot_dimension_numbers<[1], [0], [0], [1], [0, 0, 1, 1], [], []>} : vector<8x32xf32>, vector<32x32xf32>, vector<8x32xf32> -> vector<8x32xf32>
    %cst_13 = arith.constant dense<0.000000e+00> : vector<8x32xf32>
    %25 = tpu.matmul %1, %24, %cst_13 {dimension_numbers = #tpu.dot_dimension_numbers<[1], [0], [0], [1], [0, 0, 1, 1], [], []>} : vector<8x8xf32>, vector<8x32xf32>, vector<8x32xf32> -> vector<8x32xf32>
    %26 = vector.broadcast %7 : vector<1x32xf32> to vector<8x32xf32>
    %27 = arith.addf %25, %26 : vector<8x32xf32>
    %c0_14 = arith.constant 0 : index
    %c0_15 = arith.constant 0 : index
    %28 = vector.load %arg1[%c0_14, %c0_15] : memref<8x32xf32, #tpu.memory_space<vmem>>, vector<8x32xf32>
    tpu.vector_store %arg1[%c0_14, %c0_15], %27 {strides = array<i32>} : memref<8x32xf32, #tpu.memory_space<vmem>>, vector<8x32xf32>,
    return
  }
}

</mosaic_0001>

<llo_original>
// kernel: forward.1
$region0: #{forward.1}
  #allocation0 [shape = 'u32[]', space=smem, size = 0x4, offset = 0x4, fixed_abs, tag = 'smem constant byte address 0x4 - core index']
  #allocation1 [shape = 'u32[72,128]{1,0:T(1,128)}', space=vmem, size = 0x9000, scoped, tag = 'internal scratch']
  %s0 = inlined_call_operand.vmem [shape: f32[128,128], index: 0, kind: input, shape index: {}]
  %s1 = inlined_call_operand.hbm [shape: f32[8,32], index: 1, kind: output, shape index: {}]
  %s2 = sld [smem:[#allocation0]]
  $region14: #{forward.1} parent=0
    _
  %s4 = ssub.s32 1, %s2
  %s5 = scalar_select 0, %s4, %s2
  $region1: #{forward.1} parent=0
    #allocation2 [shape = 'u8[4096]{0}', space=vmem, size = 0x1000, scoped, tag = 'output window, operand 0, single buffered']
    #allocation3 [shape = 's32[1]{0}', space=sflag, size = 0x4, scoped, tag = 'scoped memory for forward.1']
    %6 = vsyncpa [#allocation3], 0
    // Predicated region
    $region2: #{forward.1} parent=1 // pred_check
      _
    $region3: #{forward.1} parent=1 // pred_check_branch
      %8 = sbr.rel (0) target = $region5
    $region4: #{forward.1} parent=1 // pred_region
      _
    $region5: #{forward.1} parent=1 // pred_fallthru
      _
    %v9 = vld [vmem:[%s0] sm:$0xff]
    %v10 = vld [vmem:[%s0 + $0x8] sm:$0xff]
    %v11 = vld [vmem:[%s0 + $0x10] sm:$0xff]
    %v12 = vld [vmem:[%s0 + $0x18] sm:$0xff]
    %v13 = vld [vmem:[%s0 + $0x20] sm:$0xff]
    %v14 = vld [vmem:[%s0 + $0x28] sm:$0xff]
    %v15 = vld [vmem:[%s0 + $0x30] sm:$0xff]
    %v16 = vld [vmem:[%s0 + $0x38] sm:$0xff]
    %v17 = vld [vmem:[%s0 + $0x40] sm:$0xff]
    %v18 = vld [vmem:[%s0 + $0x48] sm:$0xff]
    %v19 = vld [vmem:[%s0 + $0x50] sm:$0xff]
    %v20 = vld [vmem:[%s0 + $0x58] sm:$0xff]
    %v21 = vld [vmem:[%s0 + $0x60] sm:$0xff]
    %v22 = vld [vmem:[%s0 + $0x68] sm:$0xff]
    %v23 = vld [vmem:[%s0 + $0x70] sm:$0x1]
    %v24 = vld [vmem:[%s0 + $0x78] sm:$0x1]
    %v25 = vlaneseq
    %v26 = vand.u32 %v25, 127
    %v27 = vcvt.f32.s32.to.zero.pseudo %v11
    %28 = vset.pattern.permute.xlu0 0
    %29 = vperm.xlu0 %28, %v27
    %v30 = vpop.permute.xlu0 %29
    %vm31 = vcmp.eq.s32.totalorder %v26, %v30
    %v32 = vsel %vm31, 1, 0
    %v33 = vcvt.s32.f32 %v32
    %vm34 = vcmask 64512
    %v36 = vsel %vm34, %v9, 0
    %38 = vmatpush.msra.mxu0 0.0
    %39 = vmatpush.msra.mxu0 0.0
    %40 = vmatpush.msra.mxu0 0.0
    %41 = vmatpush.msra.mxu0 0.0
    %42 = vmatpush.msra.mxu0 0.0
    %43 = vmatpush.msra.mxu0 0.0
    %44 = vmatpush.msra.mxu0 0.0
    %45 = vmatpush.msra.mxu0 0.0
    %46 = vmatpush.msra.mxu0 0.0
    %47 = vmatpush.msra.mxu0 0.0
    %48 = vmatpush.msra.mxu0 0.0
    %49 = vmatpush.msra.mxu0 0.0
    %50 = vmatpush.msra.mxu0 0.0
    %51 = vmatpush.msra.mxu0 0.0
    %52 = vmatpush.msra.mxu0 0.0
    %53 = vmatpush.msra.mxu0 %v18
    %54 = vmatmul.f32.gmra.mxu0 %v36
    %v55 = vpop.f32.mrf.mxu0
    %v56 = vadd.f32 0.0, %v55
    %57 = vdwg.mxu0
    %v58 = vmax.f32 %v56, 0.0
    %v59 = vadd.f32 %v33, %v58
    %vm60 = vcmask 392192
    %v62 = vsel %vm60, %v59, 0
    %64 = vmatpush.msra.mxu0 0.0
    %65 = vmatpush.msra.mxu0 0.0
    %66 = vmatpush.msra.mxu0 0.0
    %67 = vmatpush.msra.mxu0 0.0
    %68 = vmatpush.msra.mxu0 0.0
    %69 = vmatpush.msra.mxu0 0.0
    %70 = vmatpush.msra.mxu0 0.0
    %71 = vmatpush.msra.mxu0 0.0
    %72 = vmatpush.msra.mxu0 0.0
    %73 = vmatpush.msra.mxu0 0.0
    %74 = vmatpush.msra.mxu0 %v17
    %75 = vmatpush.msra.mxu0 %v16
    %76 = vmatpush.msra.mxu0 %v15
    %77 = vmatpush.msra.mxu0 %v14
    %78 = vmatpush.msra.mxu0 %v13
    %79 = vmatpush.msra.mxu0 %v12
    %80 = vmatmul.f32.gmra.mxu0 %v62
    %v81 = vpop.f32.mrf.mxu0
    %v82 = vadd.f32 0.0, %v81
    %83 = vdwg.mxu0
    %v84 = vperm.slane %v23, 0
    %v86 = vsel %vm34, %v10, 0
    %88 = vmatpush.msra.mxu0 0.0
    %89 = vmatpush.msra.mxu0 0.0
    %90 = vmatpush.msra.mxu0 0.0
    %91 = vmatpush.msra.mxu0 0.0
    %92 = vmatpush.msra.mxu0 0.0
    %93 = vmatpush.msra.mxu0 0.0
    %94 = vmatpush.msra.mxu0 0.0
    %95 = vmatpush.msra.mxu0 0.0
    %96 = vmatpush.msra.mxu0 0.0
    %97 = vmatpush.msra.mxu0 0.0
    %98 = vmatpush.msra.mxu0 0.0
    %99 = vmatpush.msra.mxu0 0.0
    %100 = vmatpush.msra.mxu0 0.0
    %101 = vmatpush.msra.mxu0 0.0
    %102 = vmatpush.msra.mxu0 0.0
    %103 = vmatpush.msra.mxu0 %v82
    %104 = vmatmul.f32.gmra.mxu0 %v86
    %v105 = vpop.f32.mrf.mxu0
    %v106 = vadd.f32 %v84, %v105
    %107 = vdwg.mxu0
    %v108 = vmax.f32 %v106, 0.0
    %vm109 = vcmask 261120
    %v111 = vsel %vm109, %v108, 0
    %113 = vmatpush.msra.mxu0 0.0
    %114 = vmatpush.msra.mxu0 0.0
    %115 = vmatpush.msra.mxu0 0.0
    %116 = vmatpush.msra.mxu0 0.0
    %117 = vmatpush.msra.mxu0 0.0
    %118 = vmatpush.msra.mxu0 0.0
    %119 = vmatpush.msra.mxu0 0.0
    %120 = vmatpush.msra.mxu0 0.0
    %121 = vmatpush.msra.mxu0 0.0
    %122 = vmatpush.msra.mxu0 0.0
    %123 = vmatpush.msra.mxu0 0.0
    %124 = vmatpush.msra.mxu0 0.0
    %125 = vmatpush.msra.mxu0 %v22
    %126 = vmatpush.msra.mxu0 %v21
    %127 = vmatpush.msra.mxu0 %v20
    %128 = vmatpush.msra.mxu0 %v19
    %129 = vmatmul.f32.gmra.mxu0 %v111
    %v130 = vpop.f32.mrf.mxu0
    %v131 = vadd.f32 0.0, %v130
    %132 = vdwg.mxu0
    %v133 = vperm.slane %v24, 0
    %134 = vmatpush.msra.mxu0 0.0
    %135 = vmatpush.msra.mxu0 0.0
    %136 = vmatpush.msra.mxu0 0.0
    %137 = vmatpush.msra.mxu0 0.0
    %138 = vmatpush.msra.mxu0 0.0
    %139 = vmatpush.msra.mxu0 0.0
    %140 = vmatpush.msra.mxu0 0.0
    %141 = vmatpush.msra.mxu0 0.0
    %142 = vmatpush.msra.mxu0 0.0
    %143 = vmatpush.msra.mxu0 0.0
    %144 = vmatpush.msra.mxu0 0.0
    %145 = vmatpush.msra.mxu0 0.0
    %146 = vmatpush.msra.mxu0 0.0
    %147 = vmatpush.msra.mxu0 0.0
    %148 = vmatpush.msra.mxu0 0.0
    %149 = vmatpush.msra.mxu0 %v131
    %150 = vmatmul.f32.gmra.mxu0 %v86
    %v151 = vpop.f32.mrf.mxu0
    %v152 = vadd.f32 %v133, %v151
    %153 = vdwg.mxu0
    %154 = vst.msk [vmem:[#allocation2] sm:$0xff] %vm109, %v152
    // Predicated region
    $region6: #{forward.1} parent=1 // pred_check
      _
    $region7: #{forward.1} parent=1 // pred_check_branch
      %156 = sbr.rel (0) target = $region9
    $region8: #{forward.1} parent=1 // pred_region
      %158 = vsyncadd [#allocation3], 0
      %s160 = sshll.u32 [#allocation2], 4
      %s161 = int_to_ptr.vmem [resolvable:$true] %s160
      %s162 = sshll.u32 %s1, 4
      %s163 = int_to_ptr.hbm [resolvable:$true] %s162
      %165 = dma.vmem_to_hbm [thread:$0]  %s161, 128, %s163, [#allocation3]
    $region9: #{forward.1} parent=1 // pred_fallthru
      _
    // Predicated region
    $region10: #{forward.1} parent=1 // pred_check
      _
    $region11: #{forward.1} parent=1 // pred_check_branch
      %167 = sbr.rel (0) target = $region13
    $region12: #{forward.1} parent=1 // pred_region
      %169 = dma.done [#allocation3], 128
    $region13: #{forward.1} parent=1 // pred_fallthru
      _
    %170 = vsyncpa [#allocation3], 1

</llo_original>
